<compile_context>
chip_gen: v5e
topology: v5e:2x2
jax: 0.10.0
libtpu: 0.0.40
codegen_flags: <defaults>
</compile_context>

<pallas_src>
import functools

import jax
import jax.numpy as jnp
from jax.experimental import pallas as pl
from jax.experimental.pallas import tpu as pltpu


# ----------------------------------------------------------------------------
# Hyper-parameters (small, but structurally faithful to CNN_Text)
# ----------------------------------------------------------------------------
CODE_LEN = 16                  # C  (hash code length, fc1 output)
VOCAB_SIZE = 1500              # V  (must exceed padding_idx = 1386)
EMBED_DIM = 128                # D  (lane-dense: multiple of 128)
FILTER_SIZES = "3,4,5"
NUM_FILTERS = 32               # Co
PADDING_IDX = 1386
BATCH = 2                      # N
SEQ_LEN = 16                   # L
KS = tuple(int(s) for s in FILTER_SIZES.split(","))


# ----------------------------------------------------------------------------
# The single fused Pallas kernel
# ----------------------------------------------------------------------------
def _cnn_text_kernel(emb_ref, y_ref, wall_ref, cbias_ref, fc1w_ref, fc1b_ref,
                     feat_ref, hid_ref, code_ref, *, Ks, N, L, Co, alpha):
    """(emb + 1e-5*y) -> ONE MXU matmul producing every conv tap -> static
    shift-and-add per filter size -> global max-pool over time -> bias+ReLU ->
    concat -> fc1 -> tanh(alpha * hid)."""
    NL = N * L

    # x = embed(x) + y * 1e-5, flattened to (N*L, D)
    xx = emb_ref[...] + y_ref[...] * 1e-5

    # Every tap of every Conv2d(1, Co, (K, D)) in one lane-dense MXU matmul:
    # taps[:, col_block(conv ki, tap k)] == xx @ w_ki[k]           (NL, sum(Ks)*Co)
    taps = jnp.dot(xx, wall_ref[...], preferred_element_type=jnp.float32)

    pooled = []
    col = 0
    for K in Ks:
        Lout = L - K + 1
        # Shift-and-add over taps: after the loop s[n*L + t] == conv(n, t) for
        # every valid t < Lout (rows crossing a sample boundary never read below).
        s = None
        for k in range(K):
            blk = taps[k:k + NL - K + 1, col:col + Co]             # static slices
            s = blk if s is None else s + blk
            col += Co
        # Global max-pool over time, per sample (sublane-aligned row starts).
        rows = [jnp.max(s[n * L:n * L + Lout, :], axis=0, keepdims=True)
                for n in range(N)]
        pooled.append(jnp.concatenate(rows, axis=0))               # (N, Co)

    # Bias is time-invariant and ReLU is monotone -> add bias / ReLU after max.
    feat = jnp.maximum(jnp.concatenate(pooled, axis=-1) + cbias_ref[...], 0.0)
    hid = jnp.dot(feat, fc1w_ref[...],
                  preferred_element_type=jnp.float32) + fc1b_ref[...]
    feat_ref[...] = feat                     # dropout == identity (eval mode)
    hid_ref[...] = hid
    code_ref[...] = jnp.tanh(alpha * hid)    # fused tanh epilogue (EUP slot)


def cnn_text_pallas(emb, y, conv_w_packed, conv_b_packed, fc1_w, fc1_b, *,
                    Ks, alpha):
    """emb, y: (N, L, D); conv_w_packed: (D, sum(Ks)*Co); conv_b_packed: (1, F);
    fc1_w: (F, C); fc1_b: (1, C)."""
    N, L, D = emb.shape
    F = conv_b_packed.shape[-1]
    Co = F // len(Ks)
    C = fc1_w.shape[-1]
    assert conv_w_packed.shape == (D, sum(Ks) * Co)
    assert fc1_w.shape == (F, C)

    inputs = [emb.reshape(N * L, D).astype(jnp.float32),
              y.reshape(N * L, D).astype(jnp.float32),
              conv_w_packed.astype(jnp.float32),
              conv_b_packed.astype(jnp.float32),
              fc1_w.astype(jnp.float32),
              fc1_b.astype(jnp.float32)]

    vmem = pl.BlockSpec(memory_space=pltpu.MemorySpace.VMEM)
    out_shape = (jax.ShapeDtypeStruct((N, F), jnp.float32),   # feat
                 jax.ShapeDtypeStruct((N, C), jnp.float32),   # hid
                 jax.ShapeDtypeStruct((N, C), jnp.float32))   # code

    kernel = functools.partial(_cnn_text_kernel, Ks=tuple(Ks), N=N, L=L,
                               Co=Co, alpha=float(alpha))
    return pl.pallas_call(
        kernel,
        out_shape=out_shape,
        in_specs=[vmem] * len(inputs),
        out_specs=(vmem, vmem, vmem),
    )(*inputs)


# ----------------------------------------------------------------------------
# Parameters (deterministic random; all layout prep hoisted to init)
# ----------------------------------------------------------------------------
def init_params(key):
    n_keys = 3 + 2 * len(KS)
    keys = iter(jax.random.split(key, n_keys))

    # nn.Embedding(V, D, padding_idx=1386): the padding row is zero.
    embed = jax.random.normal(next(keys), (VOCAB_SIZE, EMBED_DIM), jnp.float32)
    embed = embed.at[PADDING_IDX].set(0.0)

    convs = []
    for K in KS:
        fan_in = K * EMBED_DIM
        # PyTorch layout is (Co, 1, K, D); stored here as (K, D, Co), i.e.
        # w.squeeze(1).permute(1, 2, 0), done ONCE at init.
        w = jax.random.normal(next(keys), (K, EMBED_DIM, NUM_FILTERS),
                              jnp.float32) * jnp.sqrt(2.0 / fan_in)
        b = jax.random.normal(next(keys), (1, NUM_FILTERS), jnp.float32) * 0.5
        convs.append((w, b))

    # Hoisted layout prep: pack every tap of every filter size into one
    # lane-dense (D, sum(Ks)*Co) = (128, 384) matrix; column block for
    # (conv ki, tap k) is w_ki[k].  Biases packed to (1, F).
    conv_w_packed = jnp.concatenate(
        [w.transpose(1, 0, 2).reshape(EMBED_DIM, K * NUM_FILTERS)
         for (w, _), K in zip(convs, KS)], axis=-1)
    conv_b_packed = jnp.concatenate([b for _, b in convs], axis=-1)

    F = len(KS) * NUM_FILTERS
    # nn.Linear(F, C): PyTorch weight is (C, F); stored pre-transposed (F, C).
    fc1_w = jax.random.normal(next(keys), (F, CODE_LEN),
                              jnp.float32) * jnp.sqrt(1.0 / F)
    fc1_b = jax.random.normal(next(keys), (1, CODE_LEN), jnp.float32) * 0.5
    return {"embed": embed, "convs": convs,
            "conv_w_packed": conv_w_packed, "conv_b_packed": conv_b_packed,
            "fc1_w": fc1_w, "fc1_b": fc1_b}


@functools.partial(jax.jit, static_argnames=("alpha",))
def cnn_text_forward(params, x_ids, y, alpha=1.0):
    # nn.Embedding lookup: data-dependent gather stays in plain-JAX glue.
    emb = jnp.take(params["embed"], x_ids, axis=0)                 # (N, L, D)
    return cnn_text_pallas(emb, y,
                           params["conv_w_packed"], params["conv_b_packed"],
                           params["fc1_w"], params["fc1_b"],
                           Ks=KS, alpha=alpha)


# ----------------------------------------------------------------------------
# Pure-jnp reference (for a numerical cross-check)
# ----------------------------------------------------------------------------
def _reference_forward(params, x_ids, y, alpha):
    emb = jnp.take(params["embed"], x_ids, axis=0)
    xx = emb + y * 1e-5                                            # (N, L, D)
    N, L, _ = xx.shape
    pooled = []
    for (w, b), K in zip(params["convs"], KS):
        Lout = L - K + 1
        s = None
        for k in range(K):
            t = jnp.einsum("nld,dc->nlc", xx[:, k:k + Lout, :], w[k],
                           precision="highest")
            s = t if s is None else s + t
        s = s + b                                                  # (N, Lout, Co)
        pooled.append(jnp.max(jax.nn.relu(s), axis=1))
    feat = jnp.concatenate(pooled, axis=-1)
    hid = jnp.dot(feat, params["fc1_w"], precision="highest") + params["fc1_b"]
    code = jnp.tanh(alpha * hid)
    return feat, hid, code


if __name__ == "__main__":
    key = jax.random.PRNGKey(0)
    k_param, k_x, k_y = jax.random.split(key, 3)
    params = init_params(k_param)

    x_ids = jax.random.randint(k_x, (BATCH, SEQ_LEN), 0, VOCAB_SIZE,
                               dtype=jnp.int32)
    y = jax.random.normal(k_y, (BATCH, SEQ_LEN, EMBED_DIM), jnp.float32)

    feat, hid, code = cnn_text_forward(params, x_ids, y, alpha=1.0)
    jax.block_until_ready((feat, hid, code))

    F = len(KS) * NUM_FILTERS
    assert feat.shape == (BATCH, F)
    assert hid.shape == (BATCH, CODE_LEN)
    assert code.shape == (BATCH, CODE_LEN)

    # Cross-check the fused kernel against the pure-jnp reference.
    feat_r, hid_r, code_r = _reference_forward(params, x_ids, y, alpha=1.0)
    for got, want in ((feat, feat_r), (hid, hid_r), (code, code_r)):
        err = float(jnp.max(jnp.abs(got - want)))
        assert jnp.allclose(got, want, rtol=2e-2, atol=2e-2), err

    print("KERNEL_OK")
</pallas_src>

<mosaic_0001>
module attributes {stable_mosaic.version = 11 : i64} {
  func.func @_cnn_text_kernel(%arg0: memref<32x128xf32, #tpu.memory_space<vmem>>, %arg1: memref<32x128xf32, #tpu.memory_space<vmem>>, %arg2: memref<128x384xf32, #tpu.memory_space<vmem>>, %arg3: memref<1x96xf32, #tpu.memory_space<vmem>>, %arg4: memref<96x16xf32, #tpu.memory_space<vmem>>, %arg5: memref<1x16xf32, #tpu.memory_space<vmem>>, %arg6: memref<2x96xf32, #tpu.memory_space<vmem>>, %arg7: memref<2x16xf32, #tpu.memory_space<vmem>>, %arg8: memref<2x16xf32, #tpu.memory_space<vmem>>) attributes {dimension_semantics = [], scalar_prefetch = 0 : i64, scratch_operands = 0 : i64, tpu.core_type = #tpu.core_type<tc>} {
    %c0 = arith.constant 0 : index
    %c0_0 = arith.constant 0 : index
    %0 = vector.load %arg0[%c0, %c0_0] : memref<32x128xf32, #tpu.memory_space<vmem>>, vector<32x128xf32>
    %c0_1 = arith.constant 0 : index
    %c0_2 = arith.constant 0 : index
    %1 = vector.load %arg1[%c0_1, %c0_2] : memref<32x128xf32, #tpu.memory_space<vmem>>, vector<32x128xf32>
    %cst = arith.constant 9.99999974E-6 : f32
    %2 = vector.broadcast %cst : f32 to vector<32x128xf32>
    %3 = arith.mulf %1, %2 : vector<32x128xf32>
    %4 = arith.addf %0, %3 : vector<32x128xf32>
    %c0_3 = arith.constant 0 : index
    %c0_4 = arith.constant 0 : index
    %5 = vector.load %arg2[%c0_3, %c0_4] : memref<128x384xf32, #tpu.memory_space<vmem>>, vector<128x384xf32>
    %cst_5 = arith.constant dense<0.000000e+00> : vector<32x384xf32>
    %6 = tpu.matmul %4, %5, %cst_5 {dimension_numbers = #tpu.dot_dimension_numbers<[1], [0], [0], [1], [0, 0, 1, 1], [], []>} : vector<32x128xf32>, vector<128x384xf32>, vector<32x384xf32> -> vector<32x384xf32>
    %7 = vector.extract_strided_slice %6 {offsets = [0, 0], sizes = [30, 32], strides = [1, 1]} : vector<32x384xf32> to vector<30x32xf32>
    %8 = vector.extract_strided_slice %6 {offsets = [1, 32], sizes = [30, 32], strides = [1, 1]} : vector<32x384xf32> to vector<30x32xf32>
    %9 = arith.addf %7, %8 : vector<30x32xf32>
    %10 = vector.extract_strided_slice %6 {offsets = [2, 64], sizes = [30, 32], strides = [1, 1]} : vector<32x384xf32> to vector<30x32xf32>
    %11 = arith.addf %9, %10 : vector<30x32xf32>
    %12 = vector.extract_strided_slice %11 {offsets = [0, 0], sizes = [14, 32], strides = [1, 1]} : vector<30x32xf32> to vector<14x32xf32>
    %cst_6 = arith.constant dense<0xFF800000> : vector<32xf32>
    %13 = vector.multi_reduction <maximumf>, %12, %cst_6 [0] : vector<14x32xf32> to vector<32xf32>
    %14 = vector.shape_cast %13 : vector<32xf32> to vector<1x32xf32>
    %15 = vector.extract_strided_slice %11 {offsets = [16, 0], sizes = [14, 32], strides = [1, 1]} : vector<30x32xf32> to vector<14x32xf32>
    %cst_7 = arith.constant dense<0xFF800000> : vector<32xf32>
    %16 = vector.multi_reduction <maximumf>, %15, %cst_7 [0] : vector<14x32xf32> to vector<32xf32>
    %17 = vector.shape_cast %16 : vector<32xf32> to vector<1x32xf32>
    %18 = tpu.concatenate %14, %17 in 0 : vector<1x32xf32>, vector<1x32xf32> -> vector<2x32xf32>
    %19 = vector.extract_strided_slice %6 {offsets = [0, 96], sizes = [29, 32], strides = [1, 1]} : vector<32x384xf32> to vector<29x32xf32>
    %20 = vector.extract_strided_slice %6 {offsets = [1, 128], sizes = [29, 32], strides = [1, 1]} : vector<32x384xf32> to vector<29x32xf32>
    %21 = arith.addf %19, %20 : vector<29x32xf32>
    %22 = vector.extract_strided_slice %6 {offsets = [2, 160], sizes = [29, 32], strides = [1, 1]} : vector<32x384xf32> to vector<29x32xf32>
    %23 = arith.addf %21, %22 : vector<29x32xf32>
    %24 = vector.extract_strided_slice %6 {offsets = [3, 192], sizes = [29, 32], strides = [1, 1]} : vector<32x384xf32> to vector<29x32xf32>
    %25 = arith.addf %23, %24 : vector<29x32xf32>
    %26 = vector.extract_strided_slice %25 {offsets = [0, 0], sizes = [13, 32], strides = [1, 1]} : vector<29x32xf32> to vector<13x32xf32>
    %cst_8 = arith.constant dense<0xFF800000> : vector<32xf32>
    %27 = vector.multi_reduction <maximumf>, %26, %cst_8 [0] : vector<13x32xf32> to vector<32xf32>
    %28 = vector.shape_cast %27 : vector<32xf32> to vector<1x32xf32>
    %29 = vector.extract_strided_slice %25 {offsets = [16, 0], sizes = [13, 32], strides = [1, 1]} : vector<29x32xf32> to vector<13x32xf32>
    %cst_9 = arith.constant dense<0xFF800000> : vector<32xf32>
    %30 = vector.multi_reduction <maximumf>, %29, %cst_9 [0] : vector<13x32xf32> to vector<32xf32>
    %31 = vector.shape_cast %30 : vector<32xf32> to vector<1x32xf32>
    %32 = tpu.concatenate %28, %31 in 0 : vector<1x32xf32>, vector<1x32xf32> -> vector<2x32xf32>
    %33 = vector.extract_strided_slice %6 {offsets = [0, 224], sizes = [28, 32], strides = [1, 1]} : vector<32x384xf32> to vector<28x32xf32>
    %34 = vector.extract_strided_slice %6 {offsets = [1, 256], sizes = [28, 32], strides = [1, 1]} : vector<32x384xf32> to vector<28x32xf32>
    %35 = arith.addf %33, %34 : vector<28x32xf32>
    %36 = vector.extract_strided_slice %6 {offsets = [2, 288], sizes = [28, 32], strides = [1, 1]} : vector<32x384xf32> to vector<28x32xf32>
    %37 = arith.addf %35, %36 : vector<28x32xf32>
    %38 = vector.extract_strided_slice %6 {offsets = [3, 320], sizes = [28, 32], strides = [1, 1]} : vector<32x384xf32> to vector<28x32xf32>
    %39 = arith.addf %37, %38 : vector<28x32xf32>
    %40 = vector.extract_strided_slice %6 {offsets = [4, 352], sizes = [28, 32], strides = [1, 1]} : vector<32x384xf32> to vector<28x32xf32>
    %41 = arith.addf %39, %40 : vector<28x32xf32>
    %42 = vector.extract_strided_slice %41 {offsets = [0, 0], sizes = [12, 32], strides = [1, 1]} : vector<28x32xf32> to vector<12x32xf32>
    %cst_10 = arith.constant dense<0xFF800000> : vector<32xf32>
    %43 = vector.multi_reduction <maximumf>, %42, %cst_10 [0] : vector<12x32xf32> to vector<32xf32>
    %44 = vector.shape_cast %43 : vector<32xf32> to vector<1x32xf32>
    %45 = vector.extract_strided_slice %41 {offsets = [16, 0], sizes = [12, 32], strides = [1, 1]} : vector<28x32xf32> to vector<12x32xf32>
    %cst_11 = arith.constant dense<0xFF800000> : vector<32xf32>
    %46 = vector.multi_reduction <maximumf>, %45, %cst_11 [0] : vector<12x32xf32> to vector<32xf32>
    %47 = vector.shape_cast %46 : vector<32xf32> to vector<1x32xf32>
    %48 = tpu.concatenate %44, %47 in 0 : vector<1x32xf32>, vector<1x32xf32> -> vector<2x32xf32>
    %49 = tpu.concatenate %18, %32, %48 in 1 : vector<2x32xf32>, vector<2x32xf32>, vector<2x32xf32> -> vector<2x96xf32>
    %c0_12 = arith.constant 0 : index
    %c0_13 = arith.constant 0 : index
    %50 = vector.load %arg3[%c0_12, %c0_13] : memref<1x96xf32, #tpu.memory_space<vmem>>, vector<1x96xf32>
    %51 = vector.broadcast %50 : vector<1x96xf32> to vector<2x96xf32>
    %52 = arith.addf %49, %51 : vector<2x96xf32>
    %cst_14 = arith.constant 0.000000e+00 : f32
    %53 = vector.broadcast %cst_14 : f32 to vector<2x96xf32>
    %54 = arith.maximumf %52, %53 : vector<2x96xf32>
    %c0_15 = arith.constant 0 : index
    %c0_16 = arith.constant 0 : index
    %55 = vector.load %arg4[%c0_15, %c0_16] : memref<96x16xf32, #tpu.memory_space<vmem>>, vector<96x16xf32>
    %cst_17 = arith.constant dense<0.000000e+00> : vector<2x16xf32>
    %56 = tpu.matmul %54, %55, %cst_17 {dimension_numbers = #tpu.dot_dimension_numbers<[1], [0], [0], [1], [0, 0, 1, 1], [], []>} : vector<2x96xf32>, vector<96x16xf32>, vector<2x16xf32> -> vector<2x16xf32>
    %c0_18 = arith.constant 0 : index
    %c0_19 = arith.constant 0 : index
    %57 = vector.load %arg5[%c0_18, %c0_19] : memref<1x16xf32, #tpu.memory_space<vmem>>, vector<1x16xf32>
    %58 = vector.broadcast %57 : vector<1x16xf32> to vector<2x16xf32>
    %59 = arith.addf %56, %58 : vector<2x16xf32>
    %c0_20 = arith.constant 0 : index
    %c0_21 = arith.constant 0 : index
    %60 = vector.load %arg6[%c0_20, %c0_21] : memref<2x96xf32, #tpu.memory_space<vmem>>, vector<2x96xf32>
    tpu.vector_store %arg6[%c0_20, %c0_21], %54 {strides = array<i32>} : memref<2x96xf32, #tpu.memory_space<vmem>>, vector<2x96xf32>,
    %c0_22 = arith.constant 0 : index
    %c0_23 = arith.constant 0 : index
    %61 = vector.load %arg7[%c0_22, %c0_23] : memref<2x16xf32, #tpu.memory_space<vmem>>, vector<2x16xf32>
    tpu.vector_store %arg7[%c0_22, %c0_23], %59 {strides = array<i32>} : memref<2x16xf32, #tpu.memory_space<vmem>>, vector<2x16xf32>,
    %cst_24 = arith.constant 1.000000e+00 : f32
    %62 = vector.broadcast %cst_24 : f32 to vector<2x16xf32>
    %63 = arith.mulf %62, %59 : vector<2x16xf32>
    %64 = math.tanh %63 : vector<2x16xf32>
    %c0_25 = arith.constant 0 : index
    %c0_26 = arith.constant 0 : index
    %65 = vector.load %arg8[%c0_25, %c0_26] : memref<2x16xf32, #tpu.memory_space<vmem>>, vector<2x16xf32>
    tpu.vector_store %arg8[%c0_25, %c0_26], %64 {strides = array<i32>} : memref<2x16xf32, #tpu.memory_space<vmem>>, vector<2x16xf32>,
    return
  }
}

</mosaic_0001>

<llo_original>
// kernel: cnn_text_forward.1
$region0: #{cnn_text_forward.1}
  #allocation0 [shape = 'u32[]', space=smem, size = 0x4, offset = 0x4, fixed_abs, tag = 'smem constant byte address 0x4 - core index']
  #allocation1 [shape = 'u32[72,128]{1,0:T(1,128)}', space=vmem, size = 0x9000, scoped, tag = 'internal scratch']
  %s0 = inlined_call_operand.vmem [shape: f32[32,128], index: 0, kind: input, shape index: {}]
  %s1 = inlined_call_operand.vmem [shape: f32[32,128], index: 1, kind: input, shape index: {}]
  %s2 = inlined_call_operand.hbm [shape: f32[128,384], index: 2, kind: input, shape index: {}]
  %s3 = inlined_call_operand.vmem [shape: f32[1,96], index: 3, kind: input, shape index: {}]
  %s4 = inlined_call_operand.vmem [shape: f32[96,16], index: 4, kind: input, shape index: {}]
  %s5 = inlined_call_operand.vmem [shape: f32[1,16], index: 5, kind: input, shape index: {}]
  %s6 = inlined_call_operand.hbm [shape: f32[2,96], index: 6, kind: output, shape index: {0}]
  %s7 = inlined_call_operand.hbm [shape: f32[2,16], index: 7, kind: output, shape index: {1}]
  %s8 = inlined_call_operand.hbm [shape: f32[2,16], index: 8, kind: output, shape index: {2}]
  %9 = xla_tuple %s6, %s7, %s8
  %s10 = sld [smem:[#allocation0]]
  $region54: #{cnn_text_forward.1} parent=0
    _
  %s12 = ssub.s32 1, %s10
  %s13 = scalar_select 0, %s12, %s10
  $region1: #{cnn_text_forward.1} parent=0
    #allocation2 [shape = 'u8[196608]{0}', space=vmem, size = 0x30000, scoped, tag = 'input window, operand 2, single buffered']
    #allocation3 [shape = 's32[1]{0}', space=sflag, size = 0x4, scoped, tag = 'scoped memory for cnn_text_forward.1']
    #allocation4 [shape = 's32[1]{0}', space=sflag, size = 0x4, scoped, tag = 'scoped memory for cnn_text_forward.1']
    #allocation5 [shape = 'u8[1024]{0}', space=vmem, size = 0x400, scoped, tag = 'output window, operand 0, single buffered']
    #allocation6 [shape = 'u8[1024]{0}', space=vmem, size = 0x400, scoped, tag = 'output window, operand 1, single buffered']
    #allocation7 [shape = 's32[1]{0}', space=sflag, size = 0x4, scoped, tag = 'scoped memory for cnn_text_forward.1']
    #allocation8 [shape = 'u8[1024]{0}', space=vmem, size = 0x400, scoped, tag = 'output window, operand 2, single buffered']
    %14 = vsyncpa [#allocation3], 0
    %15 = vsyncpa [#allocation4], 0
    %16 = vsyncpa [#allocation7], 0
    // Predicated region
    $region2: #{cnn_text_forward.1} parent=1 // pred_check
      _
    $region3: #{cnn_text_forward.1} parent=1 // pred_check_branch
      %18 = sbr.rel (0) target = $region5
    $region4: #{cnn_text_forward.1} parent=1 // pred_region
      _
    $region5: #{cnn_text_forward.1} parent=1 // pred_fallthru
      _
    // Predicated region
    $region6: #{cnn_text_forward.1} parent=1 // pred_check
      _
    $region7: #{cnn_text_forward.1} parent=1 // pred_check_branch
      %20 = sbr.rel (0) target = $region9
    $region8: #{cnn_text_forward.1} parent=1 // pred_region
      _
    $region9: #{cnn_text_forward.1} parent=1 // pred_fallthru
      _
    // Predicated region
    $region10: #{cnn_text_forward.1} parent=1 // pred_check
      _
    $region11: #{cnn_text_forward.1} parent=1 // pred_check_branch
      %22 = sbr.rel (0) target = $region13
    $region12: #{cnn_text_forward.1} parent=1 // pred_region
      %24 = vsyncadd [#allocation3], 0
      %s25 = sshll.u32 %s2, 4
      %s26 = int_to_ptr.hbm [resolvable:$true] %s25
      %s27 = sshll.u32 [#allocation2], 4
      %s28 = int_to_ptr.vmem [resolvable:$true] %s27
      %33 = dma.hbm_to_vmem [thread:$0]  %s26, 6144, %s28, [#allocation3], 384, 384, 24
    $region13: #{cnn_text_forward.1} parent=1 // pred_fallthru
      _
    // Predicated region
    $region14: #{cnn_text_forward.1} parent=1 // pred_check
      _
    $region15: #{cnn_text_forward.1} parent=1 // pred_check_branch
      %35 = sbr.rel (0) target = $region17
    $region16: #{cnn_text_forward.1} parent=1 // pred_region
      _
    $region17: #{cnn_text_forward.1} parent=1 // pred_fallthru
      _
    // Predicated region
    $region18: #{cnn_text_forward.1} parent=1 // pred_check
      _
    $region19: #{cnn_text_forward.1} parent=1 // pred_check_branch
      %37 = sbr.rel (0) target = $region21
    $region20: #{cnn_text_forward.1} parent=1 // pred_region
      _
    $region21: #{cnn_text_forward.1} parent=1 // pred_fallthru
      _
    // Predicated region
    $region22: #{cnn_text_forward.1} parent=1 // pred_check
      _
    $region23: #{cnn_text_forward.1} parent=1 // pred_check_branch
      %39 = sbr.rel (0) target = $region25
    $region24: #{cnn_text_forward.1} parent=1 // pred_region
      _
    $region25: #{cnn_text_forward.1} parent=1 // pred_fallthru
      _
    // Predicated region
    $region26: #{cnn_text_forward.1} parent=1 // pred_check
      _
    $region27: #{cnn_text_forward.1} parent=1 // pred_check_branch
      %41 = sbr.rel (0) target = $region29
    $region28: #{cnn_text_forward.1} parent=1 // pred_region
      %43 = dma.done [#allocation3], 6144
    $region29: #{cnn_text_forward.1} parent=1 // pred_fallthru
      _
    %v44 = vld [vmem:[%s0] sm:$0xff]
    %v45 = vld [vmem:[%s0 + $0x8] sm:$0xff]
    %v46 = vld [vmem:[%s0 + $0x10] sm:$0xff]
    %v47 = vld [vmem:[%s0 + $0x18] sm:$0xff]
    %v48 = vld [vmem:[%s1] sm:$0xff]
    %v49 = vld [vmem:[%s1 + $0x8] sm:$0xff]
    %v50 = vld [vmem:[%s1 + $0x10] sm:$0xff]
    %v51 = vld [vmem:[%s1 + $0x18] sm:$0xff]
    %v52 = vmul.f32 %v48, 1e-05
    %v53 = vmul.f32 %v49, 1e-05
    %v54 = vmul.f32 %v50, 1e-05
    %v55 = vmul.f32 %v51, 1e-05
    %v56 = vadd.f32 %v44, %v52
    %v57 = vadd.f32 %v45, %v53
    %v58 = vadd.f32 %v46, %v54
    %v59 = vadd.f32 %v47, %v55
    %v60 = vld [vmem:[#allocation2] sm:$0xff]
    %v61 = vld [vmem:[#allocation2 + $0x8] sm:$0xff]
    %v62 = vld [vmem:[#allocation2 + $0x10] sm:$0xff]
    %v63 = vld [vmem:[#allocation2 + $0x18] sm:$0xff]
    %v64 = vld [vmem:[#allocation2 + $0x20] sm:$0xff]
    %v65 = vld [vmem:[#allocation2 + $0x28] sm:$0xff]
    %v66 = vld [vmem:[#allocation2 + $0x30] sm:$0xff]
    %v67 = vld [vmem:[#allocation2 + $0x38] sm:$0xff]
    %v68 = vld [vmem:[#allocation2 + $0x40] sm:$0xff]
    %v69 = vld [vmem:[#allocation2 + $0x48] sm:$0xff]
    %v70 = vld [vmem:[#allocation2 + $0x50] sm:$0xff]
    %v71 = vld [vmem:[#allocation2 + $0x58] sm:$0xff]
    %v72 = vld [vmem:[#allocation2 + $0x60] sm:$0xff]
    %v73 = vld [vmem:[#allocation2 + $0x68] sm:$0xff]
    %v74 = vld [vmem:[#allocation2 + $0x70] sm:$0xff]
    %v75 = vld [vmem:[#allocation2 + $0x78] sm:$0xff]
    %v76 = vld [vmem:[#allocation2 + $0x80] sm:$0xff]
    %v77 = vld [vmem:[#allocation2 + $0x88] sm:$0xff]
    %v78 = vld [vmem:[#allocation2 + $0x90] sm:$0xff]
    %v79 = vld [vmem:[#allocation2 + $0x98] sm:$0xff]
    %v80 = vld [vmem:[#allocation2 + $0xa0] sm:$0xff]
    %v81 = vld [vmem:[#allocation2 + $0xa8] sm:$0xff]
    %v82 = vld [vmem:[#allocation2 + $0xb0] sm:$0xff]
    %v83 = vld [vmem:[#allocation2 + $0xb8] sm:$0xff]
    %v84 = vld [vmem:[#allocation2 + $0xc0] sm:$0xff]
    %v85 = vld [vmem:[#allocation2 + $0xc8] sm:$0xff]
    %v86 = vld [vmem:[#allocation2 + $0xd0] sm:$0xff]
    %v87 = vld [vmem:[#allocation2 + $0xd8] sm:$0xff]
    %v88 = vld [vmem:[#allocation2 + $0xe0] sm:$0xff]
    %v89 = vld [vmem:[#allocation2 + $0xe8] sm:$0xff]
    %v90 = vld [vmem:[#allocation2 + $0xf0] sm:$0xff]
    %v91 = vld [vmem:[#allocation2 + $0xf8] sm:$0xff]
    %v92 = vld [vmem:[#allocation2 + $0x100] sm:$0xff]
    %v93 = vld [vmem:[#allocation2 + $0x108] sm:$0xff]
    %v94 = vld [vmem:[#allocation2 + $0x110] sm:$0xff]
    %v95 = vld [vmem:[#allocation2 + $0x118] sm:$0xff]
    %v96 = vld [vmem:[#allocation2 + $0x120] sm:$0xff]
    %v97 = vld [vmem:[#allocation2 + $0x128] sm:$0xff]
    %v98 = vld [vmem:[#allocation2 + $0x130] sm:$0xff]
    %v99 = vld [vmem:[#allocation2 + $0x138] sm:$0xff]
    %v100 = vld [vmem:[#allocation2 + $0x140] sm:$0xff]
    %v101 = vld [vmem:[#allocation2 + $0x148] sm:$0xff]
    %v102 = vld [vmem:[#allocation2 + $0x150] sm:$0xff]
    %v103 = vld [vmem:[#allocation2 + $0x158] sm:$0xff]
    %v104 = vld [vmem:[#allocation2 + $0x160] sm:$0xff]
    %v105 = vld [vmem:[#allocation2 + $0x168] sm:$0xff]
    %v106 = vld [vmem:[#allocation2 + $0x170] sm:$0xff]
    %v107 = vld [vmem:[#allocation2 + $0x178] sm:$0xff]
    %108 = vmatpush.msra.mxu0 %v105
    %109 = vmatpush.msra.mxu0 %v102
    %110 = vmatpush.msra.mxu0 %v99
    %111 = vmatpush.msra.mxu0 %v96
    %112 = vmatpush.msra.mxu0 %v93
    %113 = vmatpush.msra.mxu0 %v90
    %114 = vmatpush.msra.mxu0 %v87
    %115 = vmatpush.msra.mxu0 %v84
    %116 = vmatpush.msra.mxu0 %v81
    %117 = vmatpush.msra.mxu0 %v78
    %118 = vmatpush.msra.mxu0 %v75
    %119 = vmatpush.msra.mxu0 %v72
    %120 = vmatpush.msra.mxu0 %v69
    %121 = vmatpush.msra.mxu0 %v66
    %122 = vmatpush.msra.mxu0 %v63
    %123 = vmatpush.msra.mxu0 %v60
    %124 = vmatmul.f32.gmra.mxu0 %v56
    %v125 = vpop.f32.mrf.mxu0
    %v126 = vadd.f32 0.0, %v125
    %127 = vmatmul.f32.gmra.mxu0 %v57
    %v128 = vpop.f32.mrf.mxu0
    %v129 = vadd.f32 0.0, %v128
    %130 = vmatmul.f32.gmra.mxu0 %v58
    %v131 = vpop.f32.mrf.mxu0
    %v132 = vadd.f32 0.0, %v131
    %133 = vmatmul.f32.gmra.mxu0 %v59
    %v134 = vpop.f32.mrf.mxu0
    %v135 = vadd.f32 0.0, %v134
    %136 = vdwg.mxu0
    %137 = vmatpush.msra.mxu0 %v106
    %138 = vmatpush.msra.mxu0 %v103
    %139 = vmatpush.msra.mxu0 %v100
    %140 = vmatpush.msra.mxu0 %v97
    %141 = vmatpush.msra.mxu0 %v94
    %142 = vmatpush.msra.mxu0 %v91
    %143 = vmatpush.msra.mxu0 %v88
    %144 = vmatpush.msra.mxu0 %v85
    %145 = vmatpush.msra.mxu0 %v82
    %146 = vmatpush.msra.mxu0 %v79
    %147 = vmatpush.msra.mxu0 %v76
    %148 = vmatpush.msra.mxu0 %v73
    %149 = vmatpush.msra.mxu0 %v70
    %150 = vmatpush.msra.mxu0 %v67
    %151 = vmatpush.msra.mxu0 %v64
    %152 = vmatpush.msra.mxu0 %v61
    %153 = vmatmul.f32.gmra.mxu0 %v56
    %v154 = vpop.f32.mrf.mxu0
    %v155 = vadd.f32 0.0, %v154
    %156 = vmatmul.f32.gmra.mxu0 %v57
    %v157 = vpop.f32.mrf.mxu0
    %v158 = vadd.f32 0.0, %v157
    %159 = vmatmul.f32.gmra.mxu0 %v58
    %v160 = vpop.f32.mrf.mxu0
    %v161 = vadd.f32 0.0, %v160
    %162 = vmatmul.f32.gmra.mxu0 %v59
    %v163 = vpop.f32.mrf.mxu0
    %v164 = vadd.f32 0.0, %v163
    %165 = vdwg.mxu0
    %166 = vmatpush.msra.mxu0 %v107
    %167 = vmatpush.msra.mxu0 %v104
    %168 = vmatpush.msra.mxu0 %v101
    %169 = vmatpush.msra.mxu0 %v98
    %170 = vmatpush.msra.mxu0 %v95
    %171 = vmatpush.msra.mxu0 %v92
    %172 = vmatpush.msra.mxu0 %v89
    %173 = vmatpush.msra.mxu0 %v86
    %174 = vmatpush.msra.mxu0 %v83
    %175 = vmatpush.msra.mxu0 %v80
    %176 = vmatpush.msra.mxu0 %v77
    %177 = vmatpush.msra.mxu0 %v74
    %178 = vmatpush.msra.mxu0 %v71
    %179 = vmatpush.msra.mxu0 %v68
    %180 = vmatpush.msra.mxu0 %v65
    %181 = vmatpush.msra.mxu0 %v62
    %182 = vmatmul.f32.gmra.mxu0 %v56
    %v183 = vpop.f32.mrf.mxu0
    %v184 = vadd.f32 0.0, %v183
    %185 = vmatmul.f32.gmra.mxu0 %v57
    %v186 = vpop.f32.mrf.mxu0
    %v187 = vadd.f32 0.0, %v186
    %188 = vmatmul.f32.gmra.mxu0 %v58
    %v189 = vpop.f32.mrf.mxu0
    %v190 = vadd.f32 0.0, %v189
    %191 = vmatmul.f32.gmra.mxu0 %v59
    %v192 = vpop.f32.mrf.mxu0
    %v193 = vadd.f32 0.0, %v192
    %194 = vdwg.mxu0
    %vm199 = vcmask 1046528
    %v200 = vrot.slane %v126, 1
    %v201 = vrot.slane %v129, 1
    %v202 = vsel %vm199, %v200, %v201
    %v203 = vrot.slane %v132, 1
    %v204 = vsel %vm199, %v201, %v203
    %v205 = vrot.slane %v135, 1
    %v206 = vsel %vm199, %v203, %v205
    %207 = vrot.lane.b32.xlu0 %v202, 96
    %v208 = vpop.permute.xlu0 %207
    %209 = vrot.lane.b32.xlu0 %v204, 96
    %v210 = vpop.permute.xlu0 %209
    %211 = vrot.lane.b32.xlu0 %v206, 96
    %v212 = vpop.permute.xlu0 %211
    %213 = vrot.lane.b32.xlu0 %v205, 96
    %v214 = vpop.permute.xlu0 %213
    %v219 = vadd.f32 %v126, %v208
    %v220 = vadd.f32 %v129, %v210
    %v221 = vadd.f32 %v132, %v212
    %v222 = vadd.f32 %v135, %v214
    %vm223 = vcmask 1045504
    %v224 = vrot.slane %v126, 2
    %v225 = vrot.slane %v129, 2
    %v226 = vsel %vm223, %v224, %v225
    %v227 = vrot.slane %v132, 2
    %v228 = vsel %vm223, %v225, %v227
    %v229 = vrot.slane %v135, 2
    %v230 = vsel %vm223, %v227, %v229
    %231 = vrot.lane.b32.xlu0 %v226, 64
    %v232 = vpop.permute.xlu0 %231
    %233 = vrot.lane.b32.xlu0 %v228, 64
    %v234 = vpop.permute.xlu0 %233
    %235 = vrot.lane.b32.xlu0 %v230, 64
    %v236 = vpop.permute.xlu0 %235
    %237 = vrot.lane.b32.xlu0 %v229, 64
    %v238 = vpop.permute.xlu0 %237
    %v243 = vadd.f32 %v219, %v232
    %v244 = vadd.f32 %v220, %v234
    %v245 = vadd.f32 %v221, %v236
    %v246 = vadd.f32 %v222, %v238
    %vm247 = vcmask 261120
    %v248 = vsel %vm247, %v243, -inf
    %vm249 = vcmask 259072
    %v250 = vsel %vm249, %v244, -inf
    %v251 = vmax.f32 %v248, %v250
    %v252 = vrot.slane %v251, 4
    %v253 = vmax.f32 %v251, %v252
    %v254 = vrot.slane %v253, 2
    %v255 = vmax.f32 %v253, %v254
    %v256 = vrot.slane %v255, 1
    %v257 = vmax.f32 %v255, %v256
    %v258 = vsel %vm247, %v245, -inf
    %v259 = vsel %vm249, %v246, -inf
    %v260 = vmax.f32 %v258, %v259
    %v261 = vrot.slane %v260, 4
    %v262 = vmax.f32 %v260, %v261
    %v263 = vrot.slane %v262, 2
    %v264 = vmax.f32 %v262, %v263
    %v265 = vrot.slane %v264, 1
    %v266 = vmax.f32 %v264, %v265
    %vm267 = vcmask 1040384
    %v268 = vsel %vm267, %v257, %v266
    %v273 = vrot.slane %v155, 1
    %v274 = vrot.slane %v158, 1
    %v275 = vsel %vm199, %v273, %v274
    %v276 = vrot.slane %v161, 1
    %v277 = vsel %vm199, %v274, %v276
    %v278 = vrot.slane %v164, 1
    %v279 = vsel %vm199, %v276, %v278
    %280 = vrot.lane.b32.xlu0 %v275, 96
    %v281 = vpop.permute.xlu0 %280
    %282 = vrot.lane.b32.xlu0 %v277, 96
    %v283 = vpop.permute.xlu0 %282
    %284 = vrot.lane.b32.xlu0 %v279, 96
    %v285 = vpop.permute.xlu0 %284
    %286 = vrot.lane.b32.xlu0 %v278, 96
    %v287 = vpop.permute.xlu0 %286
    %v292 = vadd.f32 %v126, %v281
    %v293 = vadd.f32 %v129, %v283
    %v294 = vadd.f32 %v132, %v285
    %v295 = vadd.f32 %v135, %v287
    %v296 = vrot.slane %v155, 2
    %v297 = vrot.slane %v158, 2
    %v298 = vsel %vm223, %v296, %v297
    %v299 = vrot.slane %v161, 2
    %v300 = vsel %vm223, %v297, %v299
    %v301 = vrot.slane %v164, 2
    %v302 = vsel %vm223, %v299, %v301
    %303 = vrot.lane.b32.xlu0 %v298, 64
    %v304 = vpop.permute.xlu0 %303
    %305 = vrot.lane.b32.xlu0 %v300, 64
    %v306 = vpop.permute.xlu0 %305
    %307 = vrot.lane.b32.xlu0 %v302, 64
    %v308 = vpop.permute.xlu0 %307
    %309 = vrot.lane.b32.xlu0 %v301, 64
    %v310 = vpop.permute.xlu0 %309
    %v315 = vadd.f32 %v292, %v304
    %v316 = vadd.f32 %v293, %v306
    %v317 = vadd.f32 %v294, %v308
    %v318 = vadd.f32 %v295, %v310
    %vm319 = vcmask 1044480
    %v320 = vrot.slane %v155, 3
    %v321 = vrot.slane %v158, 3
    %v322 = vsel %vm319, %v320, %v321
    %v323 = vrot.slane %v161, 3
    %v324 = vsel %vm319, %v321, %v323
    %v325 = vrot.slane %v164, 3
    %v326 = vsel %vm319, %v323, %v325
    %327 = vrot.lane.b32.xlu0 %v322, 32
    %v328 = vpop.permute.xlu0 %327
    %329 = vrot.lane.b32.xlu0 %v324, 32
    %v330 = vpop.permute.xlu0 %329
    %331 = vrot.lane.b32.xlu0 %v326, 32
    %v332 = vpop.permute.xlu0 %331
    %333 = vrot.lane.b32.xlu0 %v325, 32
    %v334 = vpop.permute.xlu0 %333
    %v339 = vadd.f32 %v315, %v328
    %v340 = vadd.f32 %v316, %v330
    %v341 = vadd.f32 %v317, %v332
    %v342 = vadd.f32 %v318, %v334
    %vm343 = vcmask 1048320
    %v344 = vsel %vm343, %v339, -inf
    %vm345 = vcmask 1045248
    %v346 = vsel %vm345, %v340, -inf
    %v347 = vmax.f32 %v344, %v346
    %v348 = vrot.slane %v347, 4
    %v349 = vmax.f32 %v347, %v348
    %v350 = vrot.slane %v349, 2
    %v351 = vmax.f32 %v349, %v350
    %v352 = vrot.slane %v351, 1
    %v353 = vmax.f32 %v351, %v352
    %v354 = vsel %vm343, %v341, -inf
    %v355 = vsel %vm345, %v342, -inf
    %v356 = vmax.f32 %v354, %v355
    %v357 = vrot.slane %v356, 4
    %v358 = vmax.f32 %v356, %v357
    %v359 = vrot.slane %v358, 2
    %v360 = vmax.f32 %v358, %v359
    %v361 = vrot.slane %v360, 1
    %v362 = vmax.f32 %v360, %v361
    %v363 = vsel %vm267, %v353, %v362
    %v368 = vrot.slane %v184, 1
    %v369 = vrot.slane %v187, 1
    %v370 = vsel %vm199, %v368, %v369
    %v371 = vrot.slane %v190, 1
    %v372 = vsel %vm199, %v369, %v371
    %v373 = vrot.slane %v193, 1
    %v374 = vsel %vm199, %v371, %v373
    %375 = vrot.lane.b32.xlu0 %v370, 96
    %v376 = vpop.permute.xlu0 %375
    %377 = vrot.lane.b32.xlu0 %v372, 96
    %v378 = vpop.permute.xlu0 %377
    %379 = vrot.lane.b32.xlu0 %v374, 96
    %v380 = vpop.permute.xlu0 %379
    %381 = vrot.lane.b32.xlu0 %v373, 96
    %v382 = vpop.permute.xlu0 %381
    %v387 = vadd.f32 %v155, %v376
    %v388 = vadd.f32 %v158, %v378
    %v389 = vadd.f32 %v161, %v380
    %v390 = vadd.f32 %v164, %v382
    %v391 = vrot.slane %v184, 2
    %v392 = vrot.slane %v187, 2
    %v393 = vsel %vm223, %v391, %v392
    %v394 = vrot.slane %v190, 2
    %v395 = vsel %vm223, %v392, %v394
    %v396 = vrot.slane %v193, 2
    %v397 = vsel %vm223, %v394, %v396
    %398 = vrot.lane.b32.xlu0 %v393, 64
    %v399 = vpop.permute.xlu0 %398
    %400 = vrot.lane.b32.xlu0 %v395, 64
    %v401 = vpop.permute.xlu0 %400
    %402 = vrot.lane.b32.xlu0 %v397, 64
    %v403 = vpop.permute.xlu0 %402
    %404 = vrot.lane.b32.xlu0 %v396, 64
    %v405 = vpop.permute.xlu0 %404
    %v410 = vadd.f32 %v387, %v399
    %v411 = vadd.f32 %v388, %v401
    %v412 = vadd.f32 %v389, %v403
    %v413 = vadd.f32 %v390, %v405
    %v414 = vrot.slane %v184, 3
    %v415 = vrot.slane %v187, 3
    %v416 = vsel %vm319, %v414, %v415
    %v417 = vrot.slane %v190, 3
    %v418 = vsel %vm319, %v415, %v417
    %v419 = vrot.slane %v193, 3
    %v420 = vsel %vm319, %v417, %v419
    %421 = vrot.lane.b32.xlu0 %v416, 32
    %v422 = vpop.permute.xlu0 %421
    %423 = vrot.lane.b32.xlu0 %v418, 32
    %v424 = vpop.permute.xlu0 %423
    %425 = vrot.lane.b32.xlu0 %v420, 32
    %v426 = vpop.permute.xlu0 %425
    %427 = vrot.lane.b32.xlu0 %v419, 32
    %v428 = vpop.permute.xlu0 %427
    %v433 = vadd.f32 %v410, %v422
    %v434 = vadd.f32 %v411, %v424
    %v435 = vadd.f32 %v412, %v426
    %v436 = vadd.f32 %v413, %v428
    %vm437 = vcmask 1043456
    %v438 = vrot.slane %v184, 4
    %v439 = vrot.slane %v187, 4
    %v440 = vsel %vm437, %v438, %v439
    %v441 = vrot.slane %v190, 4
    %v442 = vsel %vm437, %v439, %v441
    %v443 = vrot.slane %v193, 4
    %v444 = vsel %vm437, %v441, %v443
    %v449 = vadd.f32 %v433, %v440
    %v450 = vadd.f32 %v434, %v442
    %v451 = vadd.f32 %v435, %v444
    %v452 = vadd.f32 %v436, %v443
    %v453 = vsel %vm343, %v449, -inf
    %vm454 = vcmask 1044224
    %v455 = vsel %vm454, %v450, -inf
    %v456 = vmax.f32 %v453, %v455
    %v457 = vrot.slane %v456, 4
    %v458 = vmax.f32 %v456, %v457
    %v459 = vrot.slane %v458, 2
    %v460 = vmax.f32 %v458, %v459
    %v461 = vrot.slane %v460, 1
    %v462 = vmax.f32 %v460, %v461
    %v463 = vsel %vm343, %v451, -inf
    %v464 = vsel %vm454, %v452, -inf
    %v465 = vmax.f32 %v463, %v464
    %v466 = vrot.slane %v465, 4
    %v467 = vmax.f32 %v465, %v466
    %v468 = vrot.slane %v467, 2
    %v469 = vmax.f32 %v467, %v468
    %v470 = vrot.slane %v469, 1
    %v471 = vmax.f32 %v469, %v470
    %v472 = vsel %vm267, %v462, %v471
    %474 = vrot.lane.b32.xlu0 %v363, 64
    %v475 = vpop.permute.xlu0 %474
    %478 = vrot.lane.b32.xlu0 %v472, 96
    %v479 = vpop.permute.xlu0 %478
    %v481 = vsel %vm247, %v268, %v475
    %vm482 = vcmask 523264
    %v483 = vsel %vm482, %v481, %v479
    %v484 = vld [vmem:[%s3] sm:$0x1]
    %v486 = vperm.slane %v484, 0
    %v488 = vadd.f32 %v483, %v486
    %v489 = vmax.f32 %v488, 0.0
    %v490 = vld [vmem:[%s4] sm:$0xff]
    %v491 = vld [vmem:[%s4 + $0x8] sm:$0xff]
    %v492 = vld [vmem:[%s4 + $0x10] sm:$0xff]
    %v493 = vld [vmem:[%s4 + $0x18] sm:$0xff]
    %v494 = vld [vmem:[%s4 + $0x20] sm:$0xff]
    %v495 = vld [vmem:[%s4 + $0x28] sm:$0xff]
    %v496 = vld [vmem:[%s4 + $0x30] sm:$0xff]
    %v497 = vld [vmem:[%s4 + $0x38] sm:$0xff]
    %v498 = vld [vmem:[%s4 + $0x40] sm:$0xff]
    %v499 = vld [vmem:[%s4 + $0x48] sm:$0xff]
    %v500 = vld [vmem:[%s4 + $0x50] sm:$0xff]
    %v501 = vld [vmem:[%s4 + $0x58] sm:$0xff]
    %v502 = vld [vmem:[%s5] sm:$0x1]
    %v504 = vperm.slane %v502, 0
    %vm506 = vcmask 785408
    %v508 = vsel %vm506, %v489, 0
    %510 = vmatpush.msra.mxu0 0.0
    %511 = vmatpush.msra.mxu0 0.0
    %512 = vmatpush.msra.mxu0 0.0
    %513 = vmatpush.msra.mxu0 0.0
    %514 = vmatpush.msra.mxu0 %v501
    %515 = vmatpush.msra.mxu0 %v500
    %516 = vmatpush.msra.mxu0 %v499
    %517 = vmatpush.msra.mxu0 %v498
    %518 = vmatpush.msra.mxu0 %v497
    %519 = vmatpush.msra.mxu0 %v496
    %520 = vmatpush.msra.mxu0 %v495
    %521 = vmatpush.msra.mxu0 %v494
    %522 = vmatpush.msra.mxu0 %v493
    %523 = vmatpush.msra.mxu0 %v492
    %524 = vmatpush.msra.mxu0 %v491
    %525 = vmatpush.msra.mxu0 %v490
    %526 = vmatmul.f32.gmra.mxu0 %v508
    %v527 = vpop.f32.mrf.mxu0
    %v528 = vadd.f32 %v504, %v527
    %529 = vdwg.mxu0
    %vm530 = vcmask 779264
    %531 = vst.msk [vmem:[#allocation5] sm:$0x3] %vm530, %v489
    %vm532 = vcmask 123904
    %533 = vst.msk [vmem:[#allocation6] sm:$0x3] %vm532, %v528
    %v534 = vtanh.pop %v528
    %535 = vst.msk [vmem:[#allocation8] sm:$0x3] %vm532, %v534
    // Predicated region
    $region30: #{cnn_text_forward.1} parent=1 // pred_check
      _
    $region31: #{cnn_text_forward.1} parent=1 // pred_check_branch
      %537 = sbr.rel (0) target = $region33
    $region32: #{cnn_text_forward.1} parent=1 // pred_region
      %539 = vsyncadd [#allocation4], 0
      %s541 = sshll.u32 [#allocation5], 4
      %s542 = int_to_ptr.vmem [resolvable:$true] %s541
      %s543 = sshll.u32 %s6, 4
      %s544 = int_to_ptr.hbm [resolvable:$true] %s543
      %546 = dma.vmem_to_hbm [thread:$0]  %s542, 32, %s544, [#allocation4]
    $region33: #{cnn_text_forward.1} parent=1 // pred_fallthru
      _
    // Predicated region
    $region34: #{cnn_text_forward.1} parent=1 // pred_check
      _
    $region35: #{cnn_text_forward.1} parent=1 // pred_check_branch
      %548 = sbr.rel (0) target = $region37
    $region36: #{cnn_text_forward.1} parent=1 // pred_region
      %550 = vsyncadd [#allocation7], 0
      %s552 = sshll.u32 [#allocation6], 4
      %s553 = int_to_ptr.vmem [resolvable:$true] %s552
      %s554 = sshll.u32 %s7, 4
      %s555 = int_to_ptr.hbm [resolvable:$true] %s554
      %557 = dma.vmem_to_hbm [thread:$0]  %s553, 32, %s555, [#allocation7]
    $region37: #{cnn_text_forward.1} parent=1 // pred_fallthru
      _
    // Predicated region
    $region38: #{cnn_text_forward.1} parent=1 // pred_check
      _
    $region39: #{cnn_text_forward.1} parent=1 // pred_check_branch
      %559 = sbr.rel (0) target = $region41
    $region40: #{cnn_text_forward.1} parent=1 // pred_region
      %561 = vsyncadd [#allocation7], 0
      %s563 = sshll.u32 [#allocation8], 4
      %s564 = int_to_ptr.vmem [resolvable:$true] %s563
      %s565 = sshll.u32 %s8, 4
      %s566 = int_to_ptr.hbm [resolvable:$true] %s565
      %568 = dma.vmem_to_hbm [thread:$0]  %s564, 32, %s566, [#allocation7]
    $region41: #{cnn_text_forward.1} parent=1 // pred_fallthru
      _
    // Predicated region
    $region42: #{cnn_text_forward.1} parent=1 // pred_check
      _
    $region43: #{cnn_text_forward.1} parent=1 // pred_check_branch
      %570 = sbr.rel (0) target = $region45
    $region44: #{cnn_text_forward.1} parent=1 // pred_region
      %572 = dma.done [#allocation4], 32
    $region45: #{cnn_text_forward.1} parent=1 // pred_fallthru
      _
    // Predicated region
    $region46: #{cnn_text_forward.1} parent=1 // pred_check
      _
    $region47: #{cnn_text_forward.1} parent=1 // pred_check_branch
      %574 = sbr.rel (0) target = $region49
    $region48: #{cnn_text_forward.1} parent=1 // pred_region
      %576 = dma.done [#allocation7], 32
    $region49: #{cnn_text_forward.1} parent=1 // pred_fallthru
      _
    // Predicated region
    $region50: #{cnn_text_forward.1} parent=1 // pred_check
      _
    $region51: #{cnn_text_forward.1} parent=1 // pred_check_branch
      %578 = sbr.rel (0) target = $region53
    $region52: #{cnn_text_forward.1} parent=1 // pred_region
      %580 = dma.done [#allocation7], 32
    $region53: #{cnn_text_forward.1} parent=1 // pred_fallthru
      _
    %581 = vsyncpa [#allocation3], 1
    %582 = vsyncpa [#allocation4], 1
    %583 = vsyncpa [#allocation7], 1

</llo_original>
